<compile_context>
chip_gen: v7x
topology: tpu7x:2x2x1
jax: 0.10.0
libtpu: 0.0.40
codegen_flags: <defaults>
</compile_context>

<pallas_src>
import math
import jax
import jax.numpy as jnp
from jax.experimental import pallas as pl
from jax.experimental.pallas import tpu as pltpu

STATE_DIMS = 2
HID = 16          # affine1/affine2 width and LSTM input size
H_DIMS = 8        # LSTM hidden size
ACTION_DIMS = 8
LANES = 128

# ---- packed-parameter slab layout (all 8-row aligned, 128-lane padded) -------------
W1_ROW = 0        # affine1^T at [0:2,   0:16]
W2_ROW = 128      # affine2^T at [0:16,  0:16]
WL_ROW = 256      # Wih^T at [0:16, 0:32], Whh^T at [16:24, 0:32]
WH_ROW = 384      # Wa^T  at [16:24, 0:8], Wv^T  at [16:24, 8:9]
B_ROW = 512       # (bih + bhh) at [512, 0:32]
SLAB_ROWS = 520

# lane offsets inside 128-wide activation / output rows
H_OFF = 16        # hx lives at lanes 16:24 (so [h2 | hx] is a plain add, no roll)
C_OFF = 24        # cx position in the output row
VAL_OFF = ACTION_DIMS  # value at lane 8 of the output row


def policy_kernel(x_ref, slab_ref, state0_ref, out_ref, hx_scr, cx_scr):
    t = pl.program_id(0)

    # Initialize the recurrent carry on the first grid step only.
    @pl.when(t == 0)
    def _init():
        hx_scr[...] = state0_ref[0:1, :]      # h0 pre-placed at lanes 16:24
        cx_scr[...] = state0_ref[1:2, :]      # c0 at lanes 0:8

    lane = jax.lax.broadcasted_iota(jnp.int32, (1, LANES), 1)

    # Weights stay resident in VMEM for the whole rollout; static 8-aligned slices.
    w1 = slab_ref[W1_ROW:W1_ROW + LANES, :]
    w2 = slab_ref[W2_ROW:W2_ROW + LANES, :]
    wl = slab_ref[WL_ROW:WL_ROW + LANES, :]
    wh = slab_ref[WH_ROW:WH_ROW + LANES, :]
    b = slab_ref[B_ROW:B_ROW + 1, :]

    # x = relu(affine1(inputs)); x = relu(affine2(x))   (all 128-lane padded)
    x = x_ref[...]                                                     # obs in lanes 0:2
    h1 = jnp.maximum(jnp.dot(x, w1, preferred_element_type=jnp.float32), 0.0)
    h2 = jnp.maximum(jnp.dot(h1, w2, preferred_element_type=jnp.float32), 0.0)

    # Fused LSTMCell input: [h2 (lanes 0:16) | hx (lanes 16:24)] @ [Wih ; Whh] + (bih+bhh)
    hx_prev = hx_scr[...]
    combined = h2 + hx_prev
    gates = jnp.dot(combined, wl, preferred_element_type=jnp.float32) + b

    # Whole-vreg nonlinearities: tanh on the g block (lanes 16:24), sigmoid elsewhere.
    is_g = jnp.logical_and(lane >= 2 * H_DIMS, lane < 3 * H_DIMS)
    act = jnp.where(is_g, jnp.tanh(gates), jax.nn.sigmoid(gates))

    # Split only at the elementwise c/h update.
    i8 = act[:, 0 * H_DIMS:1 * H_DIMS]
    f8 = act[:, 1 * H_DIMS:2 * H_DIMS]
    g8 = act[:, 2 * H_DIMS:3 * H_DIMS]
    o8 = act[:, 3 * H_DIMS:4 * H_DIMS]

    c_prev = cx_scr[:, 0:H_DIMS]
    c_new = f8 * c_prev + i8 * g8
    h_new = o8 * jnp.tanh(c_new)

    # Update the carried state (lanes outside the data windows stay zero forever).
    hx_scr[:, H_OFF:H_OFF + H_DIMS] = h_new
    cx_scr[:, 0:H_DIMS] = c_new
    hpad = hx_scr[...]                                                 # h_new at lanes 16:24

    # Fused heads: logits in lanes 0:8, value in lane 8.
    head = jnp.dot(hpad, wh, preferred_element_type=jnp.float32)

    # Stable softmax over the 8 action lanes; EUP reciprocal + one Newton step.
    logits = jnp.where(lane < ACTION_DIMS, head, -1e30)
    m = jnp.max(logits, axis=-1, keepdims=True)
    e = jnp.exp(logits - m)
    s = jnp.sum(e, axis=-1, keepdims=True)
    r = pl.reciprocal(s, approx=True)
    r = r * (2.0 - s * r)
    prob = e * r

    # One lane-dense output row per step: [prob | value | 0.. | hx | cx | 0..]
    out_ref[...] = prob + jnp.where(lane == VAL_OFF, head, 0.0) + hpad
    out_ref[:, C_OFF:C_OFF + H_DIMS] = c_new


def policy_rollout(xs, slab, hx0, cx0):
    """Run T policy steps in one pallas_call.

    xs: (T, STATE_DIMS) f32, slab: (520, 128) packed params, hx0/cx0: (1, H_DIMS).
    Returns (probs (T,8), values (T,1), hx_T (1,8), cx_T (1,8)).
    """
    T = xs.shape[0]
    xs_pad = jnp.zeros((T, 1, LANES), jnp.float32).at[:, 0, :STATE_DIMS].set(xs)
    state0 = jnp.zeros((2, LANES), jnp.float32)
    state0 = state0.at[0, H_OFF:H_OFF + H_DIMS].set(hx0[0])
    state0 = state0.at[1, 0:H_DIMS].set(cx0[0])

    out = pl.pallas_call(
        policy_kernel,
        out_shape=jax.ShapeDtypeStruct((T, 1, LANES), jnp.float32),
        grid=(T,),
        in_specs=[
            pl.BlockSpec((None, 1, LANES), lambda t: (t, 0, 0)),     # per-step obs
            pl.BlockSpec((SLAB_ROWS, LANES), lambda t: (0, 0)),      # params, resident
            pl.BlockSpec((2, LANES), lambda t: (0, 0)),              # initial (h, c)
        ],
        out_specs=pl.BlockSpec((None, 1, LANES), lambda t: (t, 0, 0)),
        scratch_shapes=[pltpu.VMEM((1, LANES), jnp.float32),         # hx carry
                        pltpu.VMEM((1, LANES), jnp.float32)],        # cx carry
        compiler_params=pltpu.CompilerParams(
            dimension_semantics=("arbitrary",)),
    )(xs_pad, slab, state0)

    out = out[:, 0, :]
    probs = out[:, :ACTION_DIMS]
    values = out[:, VAL_OFF:VAL_OFF + 1]
    hx_new = out[-1:, H_OFF:H_OFF + H_DIMS]
    cx_new = out[-1:, C_OFF:C_OFF + H_DIMS]
    return probs, values, hx_new, cx_new


def policy_step(x, slab, hx, cx):
    """Single forward step — matches Policy.forward(inputs) semantics."""
    return policy_rollout(x.reshape(1, STATE_DIMS), slab, hx, cx)


# ------------------------------ init / packing / reference --------------------------
def xavier_normal(key, shape_out_in):
    # PyTorch xavier_normal_: std = sqrt(2/(fan_in+fan_out)); weight is (out, in).
    fan_out, fan_in = shape_out_in
    std = math.sqrt(2.0 / (fan_in + fan_out))
    return (std * jax.random.normal(key, shape_out_in, dtype=jnp.float32)).T  # (in, out)


def lstm_uniform(key, shape, hidden):
    bound = 1.0 / math.sqrt(hidden)
    return jax.random.uniform(key, shape, dtype=jnp.float32, minval=-bound, maxval=bound)


def init_raw_params(key):
    ks = jax.random.split(key, 8)
    w1 = xavier_normal(ks[0], (HID, STATE_DIMS))               # (2, 16)
    w2 = xavier_normal(ks[1], (HID, HID))                      # (16, 16)
    wih = lstm_uniform(ks[2], (4 * H_DIMS, HID), H_DIMS).T     # (16, 32)
    whh = lstm_uniform(ks[3], (4 * H_DIMS, H_DIMS), H_DIMS).T  # (8, 32)
    bih = lstm_uniform(ks[4], (1, 4 * H_DIMS), H_DIMS)         # (1, 32)
    bhh = lstm_uniform(ks[5], (1, 4 * H_DIMS), H_DIMS)         # (1, 32)
    wa = xavier_normal(ks[6], (ACTION_DIMS, H_DIMS))           # (8, 8)
    wv = xavier_normal(ks[7], (1, H_DIMS))                     # (8, 1)
    return (w1, w2, wih, whh, bih, bhh, wa, wv)


def pack_params(w1, w2, wih, whh, bih, bhh, wa, wv):
    """Pack all weights/biases into one (520, 128) f32 slab, 8-row-aligned sub-blocks."""
    slab = jnp.zeros((SLAB_ROWS, LANES), jnp.float32)
    slab = slab.at[W1_ROW:W1_ROW + STATE_DIMS, 0:HID].set(w1)
    slab = slab.at[W2_ROW:W2_ROW + HID, 0:HID].set(w2)
    slab = slab.at[WL_ROW:WL_ROW + HID, 0:4 * H_DIMS].set(wih)
    slab = slab.at[WL_ROW + HID:WL_ROW + HID + H_DIMS, 0:4 * H_DIMS].set(whh)
    slab = slab.at[WH_ROW + H_OFF:WH_ROW + H_OFF + H_DIMS, 0:ACTION_DIMS].set(wa)
    slab = slab.at[WH_ROW + H_OFF:WH_ROW + H_OFF + H_DIMS,
                   ACTION_DIMS:ACTION_DIMS + 1].set(wv)
    slab = slab.at[B_ROW, 0:4 * H_DIMS].set((bih + bhh)[0])
    return slab


def reference_rollout(xs, raw_params, hx, cx):
    (w1, w2, wih, whh, bih, bhh, wa, wv) = raw_params
    probs, values = [], []
    for t in range(xs.shape[0]):
        x = xs[t:t + 1]
        h1 = jax.nn.relu(x @ w1)
        h2 = jax.nn.relu(h1 @ w2)
        gates = h2 @ wih + bih + hx @ whh + bhh
        i_g = jax.nn.sigmoid(gates[:, 0 * H_DIMS:1 * H_DIMS])
        f_g = jax.nn.sigmoid(gates[:, 1 * H_DIMS:2 * H_DIMS])
        g_g = jnp.tanh(gates[:, 2 * H_DIMS:3 * H_DIMS])
        o_g = jax.nn.sigmoid(gates[:, 3 * H_DIMS:4 * H_DIMS])
        cx = f_g * cx + i_g * g_g
        hx = o_g * jnp.tanh(cx)
        probs.append(jax.nn.softmax(hx @ wa, axis=-1))
        values.append(hx @ wv)
    return jnp.concatenate(probs, 0), jnp.concatenate(values, 0), hx, cx


if __name__ == "__main__":
    key = jax.random.PRNGKey(0)
    pkey, xkey = jax.random.split(key)

    raw = init_raw_params(pkey)
    slab = pack_params(*raw)

    T = 8                                             # small rollout length
    xs = jax.random.normal(xkey, (T, STATE_DIMS), dtype=jnp.float32)
    hx0 = jnp.zeros((1, H_DIMS), dtype=jnp.float32)   # self.hx
    cx0 = jnp.zeros((1, H_DIMS), dtype=jnp.float32)   # self.cx

    probs, values, hxT, cxT = jax.block_until_ready(
        policy_rollout(xs, slab, hx0, cx0))

    # correctness check against a pure-JAX reference rollout
    r_probs, r_values, r_hx, r_cx = reference_rollout(xs, raw, hx0, cx0)
    assert jnp.allclose(probs, r_probs, atol=1e-4)
    assert jnp.allclose(values, r_values, atol=1e-4)
    assert jnp.allclose(hxT, r_hx, atol=1e-4)
    assert jnp.allclose(cxT, r_cx, atol=1e-4)
    assert jnp.allclose(jnp.sum(probs, axis=-1), 1.0, atol=1e-4)

    # single-step interface (matches Policy.forward on one env step)
    p1, v1, h1s, c1s = jax.block_until_ready(policy_step(xs[0:1], slab, hx0, cx0))
    assert jnp.allclose(p1, r_probs[0:1], atol=1e-4)
    assert jnp.allclose(v1, r_values[0:1], atol=1e-4)

    print("KERNEL_OK")
</pallas_src>

<mosaic_0001>
module attributes {stable_mosaic.version = 11 : i64} {
  func.func @policy_kernel(%arg0: i32, %arg1: memref<1x1x128xf32, #tpu.memory_space<vmem>>, %arg2: memref<520x128xf32, #tpu.memory_space<vmem>>, %arg3: memref<2x128xf32, #tpu.memory_space<vmem>>, %arg4: memref<1x1x128xf32, #tpu.memory_space<vmem>>, %arg5: memref<1x128xf32, #tpu.memory_space<vmem>>, %arg6: memref<1x128xf32, #tpu.memory_space<vmem>>) attributes {dimension_semantics = [#tpu.dimension_semantics<arbitrary>], iteration_bounds = array<i64: 8>, scalar_prefetch = 0 : i64, scratch_operands = 2 : i64, tpu.core_type = #tpu.core_type<tc>, window_params = [{transform_indices = @transform_0, window_bounds = array<i64: 1, 1, 128>}, {pipeline_mode = #tpu.pipeline_mode<synchronous>, transform_indices = @transform_1, window_bounds = array<i64: 520, 128>}, {pipeline_mode = #tpu.pipeline_mode<synchronous>, transform_indices = @transform_2, window_bounds = array<i64: 2, 128>}, {transform_indices = @transform_3, window_bounds = array<i64: 1, 1, 128>}]} {
    %c0_i32 = arith.constant 0 : i32
    %0 = arith.cmpi eq, %arg0, %c0_i32 : i32
    %1 = arith.extui %0 : i1 to i32
    %c0_i32_0 = arith.constant 0 : i32
    %2 = arith.cmpi ne, %1, %c0_i32_0 : i32
    scf.if %2 {
      %c0_35 = arith.constant 0 : index
      %c0_36 = arith.constant 0 : index
      %77 = vector.load %arg3[%c0_35, %c0_36] : memref<2x128xf32, #tpu.memory_space<vmem>>, vector<1x128xf32>
      %c0_37 = arith.constant 0 : index
      %c0_38 = arith.constant 0 : index
      %78 = vector.load %arg5[%c0_37, %c0_38] : memref<1x128xf32, #tpu.memory_space<vmem>>, vector<1x128xf32>
      tpu.vector_store %arg5[%c0_37, %c0_38], %77 {strides = array<i32>} : memref<1x128xf32, #tpu.memory_space<vmem>>, vector<1x128xf32>,
      %c1 = arith.constant 1 : index
      %c0_39 = arith.constant 0 : index
      %79 = vector.load %arg3[%c1, %c0_39] : memref<2x128xf32, #tpu.memory_space<vmem>>, vector<1x128xf32>
      %c0_40 = arith.constant 0 : index
      %c0_41 = arith.constant 0 : index
      %80 = vector.load %arg6[%c0_40, %c0_41] : memref<1x128xf32, #tpu.memory_space<vmem>>, vector<1x128xf32>
      tpu.vector_store %arg6[%c0_40, %c0_41], %79 {strides = array<i32>} : memref<1x128xf32, #tpu.memory_space<vmem>>, vector<1x128xf32>,
    } else {
    }
    %3 = tpu.iota {dimensions = array<i32: 1>} : vector<1x128xi32>
    %c0 = arith.constant 0 : index
    %c0_1 = arith.constant 0 : index
    %4 = vector.load %arg2[%c0, %c0_1] : memref<520x128xf32, #tpu.memory_space<vmem>>, vector<128x128xf32>
    %c128 = arith.constant 128 : index
    %c0_2 = arith.constant 0 : index
    %5 = vector.load %arg2[%c128, %c0_2] : memref<520x128xf32, #tpu.memory_space<vmem>>, vector<128x128xf32>
    %c256 = arith.constant 256 : index
    %c0_3 = arith.constant 0 : index
    %6 = vector.load %arg2[%c256, %c0_3] : memref<520x128xf32, #tpu.memory_space<vmem>>, vector<128x128xf32>
    %c384 = arith.constant 384 : index
    %c0_4 = arith.constant 0 : index
    %7 = vector.load %arg2[%c384, %c0_4] : memref<520x128xf32, #tpu.memory_space<vmem>>, vector<128x128xf32>
    %c512 = arith.constant 512 : index
    %c0_5 = arith.constant 0 : index
    %8 = vector.load %arg2[%c512, %c0_5] : memref<520x128xf32, #tpu.memory_space<vmem>>, vector<1x128xf32>
    %c0_6 = arith.constant 0 : index
    %c0_7 = arith.constant 0 : index
    %c0_8 = arith.constant 0 : index
    %9 = vector.load %arg1[%c0_6, %c0_7, %c0_8] : memref<1x1x128xf32, #tpu.memory_space<vmem>>, vector<1x1x128xf32>
    %10 = vector.shape_cast %9 : vector<1x1x128xf32> to vector<1x128xf32>
    %cst = arith.constant dense<0.000000e+00> : vector<1x128xf32>
    %11 = tpu.matmul %10, %4, %cst {dimension_numbers = #tpu.dot_dimension_numbers<[1], [0], [0], [1], [0, 0, 1, 1], [], []>} : vector<1x128xf32>, vector<128x128xf32>, vector<1x128xf32> -> vector<1x128xf32>
    %cst_9 = arith.constant 0.000000e+00 : f32
    %12 = vector.broadcast %cst_9 : f32 to vector<1x128xf32>
    %13 = arith.maximumf %11, %12 : vector<1x128xf32>
    %cst_10 = arith.constant dense<0.000000e+00> : vector<1x128xf32>
    %14 = tpu.matmul %13, %5, %cst_10 {dimension_numbers = #tpu.dot_dimension_numbers<[1], [0], [0], [1], [0, 0, 1, 1], [], []>} : vector<1x128xf32>, vector<128x128xf32>, vector<1x128xf32> -> vector<1x128xf32>
    %cst_11 = arith.constant 0.000000e+00 : f32
    %15 = vector.broadcast %cst_11 : f32 to vector<1x128xf32>
    %16 = arith.maximumf %14, %15 : vector<1x128xf32>
    %c0_12 = arith.constant 0 : index
    %c0_13 = arith.constant 0 : index
    %17 = vector.load %arg5[%c0_12, %c0_13] : memref<1x128xf32, #tpu.memory_space<vmem>>, vector<1x128xf32>
    %18 = arith.addf %16, %17 : vector<1x128xf32>
    %cst_14 = arith.constant dense<0.000000e+00> : vector<1x128xf32>
    %19 = tpu.matmul %18, %6, %cst_14 {dimension_numbers = #tpu.dot_dimension_numbers<[1], [0], [0], [1], [0, 0, 1, 1], [], []>} : vector<1x128xf32>, vector<128x128xf32>, vector<1x128xf32> -> vector<1x128xf32>
    %20 = arith.addf %19, %8 : vector<1x128xf32>
    %c16_i32 = arith.constant 16 : i32
    %21 = vector.broadcast %c16_i32 : i32 to vector<1x128xi32>
    %22 = arith.cmpi sge, %3, %21 : vector<1x128xi32>
    %c24_i32 = arith.constant 24 : i32
    %23 = vector.broadcast %c24_i32 : i32 to vector<1x128xi32>
    %24 = arith.cmpi slt, %3, %23 : vector<1x128xi32>
    %25 = arith.andi %22, %24 : vector<1x128xi1>
    %26 = math.tanh %20 : vector<1x128xf32>
    %27 = arith.negf %20 : vector<1x128xf32>
    %28 = math.exp %27 : vector<1x128xf32>
    %cst_15 = arith.constant 1.000000e+00 : f32
    %29 = vector.broadcast %cst_15 : f32 to vector<1x128xf32>
    %30 = arith.addf %29, %28 : vector<1x128xf32>
    %31 = arith.divf %29, %30 : vector<1x128xf32>
    %32 = arith.select %25, %26, %31 : vector<1x128xi1>, vector<1x128xf32>
    %33 = vector.extract_strided_slice %32 {offsets = [0, 0], sizes = [1, 8], strides = [1, 1]} : vector<1x128xf32> to vector<1x8xf32>
    %34 = vector.extract_strided_slice %32 {offsets = [0, 8], sizes = [1, 8], strides = [1, 1]} : vector<1x128xf32> to vector<1x8xf32>
    %35 = vector.extract_strided_slice %32 {offsets = [0, 16], sizes = [1, 8], strides = [1, 1]} : vector<1x128xf32> to vector<1x8xf32>
    %36 = vector.extract_strided_slice %32 {offsets = [0, 24], sizes = [1, 8], strides = [1, 1]} : vector<1x128xf32> to vector<1x8xf32>
    %c0_16 = arith.constant 0 : index
    %c0_17 = arith.constant 0 : index
    %37 = vector.load %arg6[%c0_16, %c0_17] : memref<1x128xf32, #tpu.memory_space<vmem>>, vector<1x8xf32>
    %38 = arith.mulf %34, %37 : vector<1x8xf32>
    %39 = arith.mulf %33, %35 : vector<1x8xf32>
    %40 = arith.addf %38, %39 : vector<1x8xf32>
    %41 = math.tanh %40 : vector<1x8xf32>
    %42 = arith.mulf %36, %41 : vector<1x8xf32>
    %c0_18 = arith.constant 0 : index
    %c16 = arith.constant 16 : index
    %43 = vector.load %arg5[%c0_18, %c16] : memref<1x128xf32, #tpu.memory_space<vmem>>, vector<1x8xf32>
    tpu.vector_store %arg5[%c0_18, %c16], %42 {strides = array<i32>} : memref<1x128xf32, #tpu.memory_space<vmem>>, vector<1x8xf32>,
    %c0_19 = arith.constant 0 : index
    %c0_20 = arith.constant 0 : index
    %44 = vector.load %arg6[%c0_19, %c0_20] : memref<1x128xf32, #tpu.memory_space<vmem>>, vector<1x8xf32>
    tpu.vector_store %arg6[%c0_19, %c0_20], %40 {strides = array<i32>} : memref<1x128xf32, #tpu.memory_space<vmem>>, vector<1x8xf32>,
    %c0_21 = arith.constant 0 : index
    %c0_22 = arith.constant 0 : index
    %45 = vector.load %arg5[%c0_21, %c0_22] : memref<1x128xf32, #tpu.memory_space<vmem>>, vector<1x128xf32>
    %cst_23 = arith.constant dense<0.000000e+00> : vector<1x128xf32>
    %46 = tpu.matmul %45, %7, %cst_23 {dimension_numbers = #tpu.dot_dimension_numbers<[1], [0], [0], [1], [0, 0, 1, 1], [], []>} : vector<1x128xf32>, vector<128x128xf32>, vector<1x128xf32> -> vector<1x128xf32>
    %c8_i32 = arith.constant 8 : i32
    %47 = vector.broadcast %c8_i32 : i32 to vector<1x128xi32>
    %48 = arith.cmpi slt, %3, %47 : vector<1x128xi32>
    %cst_24 = arith.constant -1.000000e+30 : f32
    %49 = vector.broadcast %cst_24 : f32 to vector<1x128xf32>
    %50 = arith.select %48, %46, %49 : vector<1x128xi1>, vector<1x128xf32>
    %cst_25 = arith.constant dense<0xFF800000> : vector<1xf32>
    %51 = vector.multi_reduction <maximumf>, %50, %cst_25 [1] : vector<1x128xf32> to vector<1xf32>
    %52 = vector.shape_cast %51 : vector<1xf32> to vector<1x1xf32>
    %53 = vector.broadcast %52 : vector<1x1xf32> to vector<1x128xf32>
    %54 = arith.subf %50, %53 : vector<1x128xf32>
    %55 = math.exp %54 : vector<1x128xf32>
    %cst_26 = arith.constant dense<0.000000e+00> : vector<1xf32>
    %56 = vector.multi_reduction <add>, %55, %cst_26 [1] : vector<1x128xf32> to vector<1xf32>
    %57 = vector.shape_cast %56 : vector<1xf32> to vector<1x1xf32>
    %58 = tpu.reciprocal %57 {approx = true} : vector<1x1xf32> -> vector<1x1xf32>
    %59 = arith.mulf %57, %58 : vector<1x1xf32>
    %cst_27 = arith.constant 2.000000e+00 : f32
    %60 = vector.broadcast %cst_27 : f32 to vector<1x1xf32>
    %61 = arith.subf %60, %59 : vector<1x1xf32>
    %62 = arith.mulf %58, %61 : vector<1x1xf32>
    %63 = vector.broadcast %62 : vector<1x1xf32> to vector<1x128xf32>
    %64 = arith.mulf %55, %63 : vector<1x128xf32>
    %c8_i32_28 = arith.constant 8 : i32
    %65 = vector.broadcast %c8_i32_28 : i32 to vector<1x128xi32>
    %66 = arith.cmpi eq, %3, %65 : vector<1x128xi32>
    %cst_29 = arith.constant 0.000000e+00 : f32
    %67 = vector.broadcast %cst_29 : f32 to vector<1x128xf32>
    %68 = arith.select %66, %46, %67 : vector<1x128xi1>, vector<1x128xf32>
    %69 = arith.addf %64, %68 : vector<1x128xf32>
    %70 = arith.addf %69, %45 : vector<1x128xf32>
    %c0_30 = arith.constant 0 : index
    %c0_31 = arith.constant 0 : index
    %c0_32 = arith.constant 0 : index
    %71 = vector.load %arg4[%c0_30, %c0_31, %c0_32] : memref<1x1x128xf32, #tpu.memory_space<vmem>>, vector<1x1x128xf32>
    %72 = vector.shape_cast %71 : vector<1x1x128xf32> to vector<1x128xf32>
    %73 = vector.shape_cast %70 : vector<1x128xf32> to vector<1x1x128xf32>
    tpu.vector_store %arg4[%c0_30, %c0_31, %c0_32], %73 {strides = array<i32>} : memref<1x1x128xf32, #tpu.memory_space<vmem>>, vector<1x1x128xf32>,
    %c0_33 = arith.constant 0 : index
    %c0_34 = arith.constant 0 : index
    %c24 = arith.constant 24 : index
    %74 = vector.load %arg4[%c0_33, %c0_34, %c24] : memref<1x1x128xf32, #tpu.memory_space<vmem>>, vector<1x1x8xf32>
    %75 = vector.shape_cast %74 : vector<1x1x8xf32> to vector<1x8xf32>
    %76 = vector.shape_cast %40 : vector<1x8xf32> to vector<1x1x8xf32>
    tpu.vector_store %arg4[%c0_33, %c0_34, %c24], %76 {strides = array<i32>} : memref<1x1x128xf32, #tpu.memory_space<vmem>>, vector<1x1x8xf32>,
    return
  }
  func.func @transform_0(%arg0: i32) -> (i32, i32, i32) {
    %c0_i32 = arith.constant 0 : i32
    %c0_i32_0 = arith.constant 0 : i32
    %c0_i32_1 = arith.constant 0 : i32
    return %arg0, %c0_i32, %c0_i32_0 : i32, i32, i32
  }
  func.func @transform_1(%arg0: i32) -> (i32, i32) {
    %c0_i32 = arith.constant 0 : i32
    %c0_i32_0 = arith.constant 0 : i32
    %c0_i32_1 = arith.constant 0 : i32
    return %c0_i32, %c0_i32_0 : i32, i32
  }
  func.func @transform_2(%arg0: i32) -> (i32, i32) {
    %c0_i32 = arith.constant 0 : i32
    %c0_i32_0 = arith.constant 0 : i32
    %c0_i32_1 = arith.constant 0 : i32
    return %c0_i32, %c0_i32_0 : i32, i32
  }
  func.func @transform_3(%arg0: i32) -> (i32, i32, i32) {
    %c0_i32 = arith.constant 0 : i32
    %c0_i32_0 = arith.constant 0 : i32
    %c0_i32_1 = arith.constant 0 : i32
    return %arg0, %c0_i32, %c0_i32_0 : i32, i32, i32
  }
}

</mosaic_0001>

<llo_original>
// kernel: tpu_custom_call.1
$region0: #{tpu_custom_call.1}
  #allocation0 [shape = 'u32[]', space=smem, size = 0x4, offset = 0x4, fixed_abs, tag = 'smem constant byte address 0x4 - core index']
  #allocation1 [shape = 'u32[144,128]{1,0:T(1,128)}', space=vmem, size = 0x12000, scoped, tag = 'internal scratch']
  #allocation2 [shape = 'f32[1,128]{1,0:T(1,128)}', space=vmem, size = 0x200, scoped, tag = 'scratch operand']
  #allocation3 [shape = 'f32[1,128]{1,0:T(1,128)}', space=vmem, size = 0x200, scoped, tag = 'scratch operand']
  %s0 = inlined_call_operand.hbm [shape: f32[8,1,128], index: 0, kind: input, shape index: {}]
  %s1 = inlined_call_operand.hbm [shape: f32[520,128], index: 1, kind: input, shape index: {}]
  %s2 = inlined_call_operand.vmem [shape: f32[2,128], index: 2, kind: input, shape index: {}]
  %s3 = inlined_call_operand.hbm [shape: f32[8,1,128], index: 3, kind: output, shape index: {}]
  %s4 = sld [smem:[#allocation0]]
  $region57: #{tpu_custom_call.1} parent=0
    _
  %s6 = ssub.s32 1, %s4
  %s7 = scalar_select 0, %s6, %s4
  $region1: #{tpu_custom_call.1} parent=0
    #allocation4 [shape = 'u8[1024]{0}', space=vmem, size = 0x400, scoped, tag = 'input window, operand 0']
    #allocation5 [shape = 's32[2]{0}', space=sflag, size = 0x8, scoped, tag = 'scoped memory for tpu_custom_call.1']
    #allocation6 [shape = 's32[2]{0}', space=sflag, size = 0x8, scoped, tag = 'scoped memory for tpu_custom_call.1']
    #allocation7 [shape = 'u8[266240]{0}', space=vmem, size = 0x41000, scoped, tag = 'input window, operand 1, single buffered']
    #allocation8 [shape = 's32[1]{0}', space=sflag, size = 0x4, scoped, tag = 'scoped memory for tpu_custom_call.1']
    #allocation9 [shape = 'u8[1024]{0}', space=vmem, size = 0x400, scoped, tag = 'output window, operand 0']
    %8 = vsyncpa [#allocation5], 0
    %s9 = scalar_lea.sflag [#allocation5], 1
    %10 = vsyncpa %s9, 0
    %11 = vsyncpa [#allocation8], 0
    %12 = vsyncpa [#allocation6], 0
    %s13 = scalar_lea.sflag [#allocation6], 1
    %14 = vsyncpa %s13, 0
    loop: start=0, step=1, limit=10
    $region2: #{tpu_custom_call.1} parent=1 // loop_pre_header
      _
    $region3: #{tpu_custom_call.1} parent=1 // loop_header
      %s16 = sphi 0, %s20
      %p17 = scmp.ge.s32.totalorder %s16, 10
      %s26 = sphi 0, %s28
      %s29 = sphi 0, %s26
      %s30 = sphi 0, %s29
      %s46 = sphi 0, %s30
      %s50 = sphi 0, %s50
      %s52 = sphi 0, %s50
      %s53 = sphi 0, %s52
      %s67 = sphi 0, %s53
      %s71 = sphi 0, %s71
      %s73 = sphi 0, %s71
      %s74 = sphi 0, %s73
      %s88 = sphi 0, %s74
      %s94 = sphi 0, %s96
      %s97 = sphi 0, %s94
      %s98 = sphi 0, %s97
      %s114 = sphi 0, %s98
    $region4: #{tpu_custom_call.1} parent=1 // loop_header_branch
      %19 = sbr.rel (%p17) target = $region8
    $region5: #{tpu_custom_call.1} parent=1 // loop_body
      %s21 = ssub.s32 %s16, 1
      %s22 = ssub.s32 %s16, 2
      %s23 = sadd.s32 %s16, 1
      %s24 = ssub.s32 %s16, %s23
      %p25 = scmp.eq.s32.totalorder %s24, 0
      %s27 = sadd.s32 %s26, 1
      %s28 = scalar_select %p25, %s26, %s27
      %p31 = pneg %p25
      %p32 = scmp.eq.s32.totalorder %s16, 7
      %p33 = por %p31, %p32
      %p34 = scmp.ne.s32.totalorder %s26, %s29
      %p35 = scmp.eq.s32.totalorder %s16, 0
      %p36 = por %p34, %p35
      %p37 = scmp.ne.s32.totalorder %s26, %s29
      %p38 = scmp.eq.s32.totalorder %s21, 7
      %p39 = por %p37, %p38
      %p40 = scmp.ne.s32.totalorder %s29, %s30
      %p41 = scmp.eq.s32.totalorder %s21, 0
      %p42 = por %p40, %p41
      %p43 = scmp.ne.s32.totalorder %s29, %s30
      %p44 = scmp.eq.s32.totalorder %s22, 7
      %p45 = por %p43, %p44
      %p47 = scmp.ne.s32.totalorder %s30, %s46
      %p48 = scmp.eq.s32.totalorder %s22, 0
      %p49 = por %p47, %p48
      %s51 = sadd.s32 %s50, 1
      %p54 = scmp.eq.s32.totalorder %s16, 7
      %p55 = scmp.ne.s32.totalorder %s50, %s52
      %p56 = scmp.eq.s32.totalorder %s16, 0
      %p57 = por %p55, %p56
      %p58 = scmp.ne.s32.totalorder %s50, %s52
      %p59 = scmp.eq.s32.totalorder %s21, 7
      %p60 = por %p58, %p59
      %p61 = scmp.ne.s32.totalorder %s52, %s53
      %p62 = scmp.eq.s32.totalorder %s21, 0
      %p63 = por %p61, %p62
      %p64 = scmp.ne.s32.totalorder %s52, %s53
      %p65 = scmp.eq.s32.totalorder %s22, 7
      %p66 = por %p64, %p65
      %p68 = scmp.ne.s32.totalorder %s53, %s67
      %p69 = scmp.eq.s32.totalorder %s22, 0
      %p70 = por %p68, %p69
      %s72 = sadd.s32 %s71, 1
      %p75 = scmp.eq.s32.totalorder %s16, 7
      %p76 = scmp.ne.s32.totalorder %s71, %s73
      %p77 = scmp.eq.s32.totalorder %s16, 0
      %p78 = por %p76, %p77
      %p79 = scmp.ne.s32.totalorder %s71, %s73
      %p80 = scmp.eq.s32.totalorder %s21, 7
      %p81 = por %p79, %p80
      %p82 = scmp.ne.s32.totalorder %s73, %s74
      %p83 = scmp.eq.s32.totalorder %s21, 0
      %p84 = por %p82, %p83
      %p85 = scmp.ne.s32.totalorder %s73, %s74
      %p86 = scmp.eq.s32.totalorder %s22, 7
      %p87 = por %p85, %p86
      %p89 = scmp.ne.s32.totalorder %s74, %s88
      %p90 = scmp.eq.s32.totalorder %s22, 0
      %p91 = por %p89, %p90
      %s92 = ssub.s32 %s16, %s23
      %p93 = scmp.eq.s32.totalorder %s92, 0
      %s95 = sadd.s32 %s94, 1
      %s96 = scalar_select %p93, %s94, %s95
      %p99 = pneg %p93
      %p100 = scmp.eq.s32.totalorder %s16, 7
      %p101 = por %p99, %p100
      %p102 = scmp.ne.s32.totalorder %s94, %s97
      %p103 = scmp.eq.s32.totalorder %s16, 0
      %p104 = por %p102, %p103
      %p105 = scmp.ne.s32.totalorder %s94, %s97
      %p106 = scmp.eq.s32.totalorder %s21, 7
      %p107 = por %p105, %p106
      %p108 = scmp.ne.s32.totalorder %s97, %s98
      %p109 = scmp.eq.s32.totalorder %s21, 0
      %p110 = por %p108, %p109
      %p111 = scmp.ne.s32.totalorder %s97, %s98
      %p112 = scmp.eq.s32.totalorder %s22, 7
      %p113 = por %p111, %p112
      %p115 = scmp.ne.s32.totalorder %s98, %s114
      %p116 = scmp.eq.s32.totalorder %s22, 0
      %p117 = por %p115, %p116
      %p118 = scmp.le.s32.totalorder 1, %s16
      %p119 = scmp.lt.s32.totalorder %s16, 9
      %p120 = pnand %p118, %p119
      %p121 = pneg %p120
      // Predicated region
      $region9: #{tpu_custom_call.1} parent=5 // pred_check
        _
      $region10: #{tpu_custom_call.1} parent=5 // pred_check_branch
        %123 = sbr.rel (%p120) target = $region12
      $region11: #{tpu_custom_call.1} parent=5 // pred_region
        %s124 = ssub.s32 %s16, 1
        // Predicated region
        $region13: #{tpu_custom_call.1} parent=11 // pred_check
          %p125 = pneg %p63
        $region14: #{tpu_custom_call.1} parent=11 // pred_check_branch
          %127 = sbr.rel (%p125) target = $region16
        $region15: #{tpu_custom_call.1} parent=11 // pred_region
          %s129 = ssub.s32 8320, 8320
          %130 = vsyncadd [#allocation8], %s129
          %s131 = sshll.u32 [#allocation7], 4
          %s132 = int_to_ptr.vmem [resolvable:$true] %s131
          %137 = dma.hbm_to_vmem [thread:$0]  %s1, 8320, %s132, [#allocation8], 128, 128, 8
        $region16: #{tpu_custom_call.1} parent=11 // pred_fallthru
          _
        // Predicated region
        $region17: #{tpu_custom_call.1} parent=11 // pred_check
          %p138 = pneg %p84
        $region18: #{tpu_custom_call.1} parent=11 // pred_check_branch
          %140 = sbr.rel (%p138) target = $region20
        $region19: #{tpu_custom_call.1} parent=11 // pred_region
          _
        $region20: #{tpu_custom_call.1} parent=11 // pred_fallthru
          _
      $region12: #{tpu_custom_call.1} parent=5 // pred_fallthru
        _
      %p141 = scmp.lt.s32.totalorder %s16, 8
      // Predicated region
      $region21: #{tpu_custom_call.1} parent=5 // pred_check
        %p142 = pneg %p141
      $region22: #{tpu_custom_call.1} parent=5 // pred_check_branch
        %144 = sbr.rel (%p142) target = $region24
      $region23: #{tpu_custom_call.1} parent=5 // pred_region
        // Predicated region
        $region25: #{tpu_custom_call.1} parent=23 // pred_check
          %p145 = pneg %p36
        $region26: #{tpu_custom_call.1} parent=23 // pred_check_branch
          %147 = sbr.rel (%p145) target = $region28
        $region27: #{tpu_custom_call.1} parent=23 // pred_region
          %s148 = sand.u32 %s26, 1
          %s149 = scalar_lea.sflag [#allocation5], %s148
          %s150 = sand.u32 %s26, 1
          %s151 = scalar_lea.vmem [#allocation4], %s150
          %s153 = ssub.s32 16, 16
          %154 = vsyncadd %s149, %s153
          %s155 = smul.addr %s16, 16
          %s156 = scalar_lea.hbm %s0, %s155
          %s158 = sshll.u32 %s151, 4
          %s159 = int_to_ptr.vmem [resolvable:$true] %s158
          %161 = dma.hbm_to_vmem [thread:$0]  %s156, 16, %s159, %s149
        $region28: #{tpu_custom_call.1} parent=23 // pred_fallthru
          _
      $region24: #{tpu_custom_call.1} parent=5 // pred_fallthru
        _
      %p162 = scmp.le.s32.totalorder 1, %s16
      %p163 = scmp.lt.s32.totalorder %s16, 9
      %p164 = pnand %p162, %p163
      %p165 = pneg %p164
      // Predicated region
      $region29: #{tpu_custom_call.1} parent=5 // pred_check
        _
      $region30: #{tpu_custom_call.1} parent=5 // pred_check_branch
        %167 = sbr.rel (%p164) target = $region32
      $region31: #{tpu_custom_call.1} parent=5 // pred_region
        %s168 = ssub.s32 %s16, 1
        %s169 = sand.u32 %s29, 1
        %s170 = scalar_lea.sflag [#allocation5], %s169
        %s171 = sand.u32 %s29, 1
        %s172 = scalar_lea.vmem [#allocation4], %s171
        // Predicated region
        $region33: #{tpu_custom_call.1} parent=31 // pred_check
          %p173 = pneg %p42
        $region34: #{tpu_custom_call.1} parent=31 // pred_check_branch
          %175 = sbr.rel (%p173) target = $region36
        $region35: #{tpu_custom_call.1} parent=31 // pred_region
          %176 = dma.done %s170, 16
        $region36: #{tpu_custom_call.1} parent=31 // pred_fallthru
          _
        // Predicated region
        $region37: #{tpu_custom_call.1} parent=31 // pred_check
          %p177 = pneg %p63
        $region38: #{tpu_custom_call.1} parent=31 // pred_check_branch
          %179 = sbr.rel (%p177) target = $region40
        $region39: #{tpu_custom_call.1} parent=31 // pred_region
          %180 = dma.done [#allocation8], 8320
        $region40: #{tpu_custom_call.1} parent=31 // pred_fallthru
          _
        %s181 = sand.u32 %s29, 1
        %s182 = scalar_lea.sflag [#allocation5], %s181
        %s183 = sand.u32 %s29, 1
        %s184 = scalar_lea.vmem [#allocation4], %s183
        %p185 = pneg %p42
        %p186 = pneg %p39
        %p187 = pneg %p63
        %p188 = pneg %p60
        %p189 = pneg %p84
        %p190 = pneg %p81
        %p191 = pneg %p110
        %p192 = pneg %p107
        %s193 = sand.u32 %s97, 1
        %s194 = scalar_lea.sflag [#allocation6], %s193
        %s195 = sand.u32 %s97, 1
        %s196 = scalar_lea.vmem [#allocation9], %s195
        %p197 = scmp.eq.s32.totalorder %s21, 0
        // Predicated region
        $region41: #{tpu_custom_call.1} parent=31 // pred_check
          %p198 = pneg %p197
        $region42: #{tpu_custom_call.1} parent=31 // pred_check_branch
          %200 = sbr.rel (%p198) target = $region44
        $region43: #{tpu_custom_call.1} parent=31 // pred_region
          %v201 = vld [vmem:[%s2] sm:$0x1]
          %202 = vst [vmem:[#allocation2] sm:$0x1] %v201
          %v203 = vld [vmem:[%s2 + $0x1] sm:$0x1]
          %204 = vst [vmem:[#allocation3] sm:$0x1] %v203
        $region44: #{tpu_custom_call.1} parent=31 // pred_fallthru
          _
        %v205 = vlaneseq
        %v206 = vand.u32 %v205, 127
        %v207 = vld [vmem:[#allocation7] sm:$0xff]
        %v208 = vld [vmem:[#allocation7 + $0x8] sm:$0xff]
        %v209 = vld [vmem:[#allocation7 + $0x10] sm:$0xff]
        %v210 = vld [vmem:[#allocation7 + $0x18] sm:$0xff]
        %v211 = vld [vmem:[#allocation7 + $0x20] sm:$0xff]
        %v212 = vld [vmem:[#allocation7 + $0x28] sm:$0xff]
        %v213 = vld [vmem:[#allocation7 + $0x30] sm:$0xff]
        %v214 = vld [vmem:[#allocation7 + $0x38] sm:$0xff]
        %v215 = vld [vmem:[#allocation7 + $0x40] sm:$0xff]
        %v216 = vld [vmem:[#allocation7 + $0x48] sm:$0xff]
        %v217 = vld [vmem:[#allocation7 + $0x50] sm:$0xff]
        %v218 = vld [vmem:[#allocation7 + $0x58] sm:$0xff]
        %v219 = vld [vmem:[#allocation7 + $0x60] sm:$0xff]
        %v220 = vld [vmem:[#allocation7 + $0x68] sm:$0xff]
        %v221 = vld [vmem:[#allocation7 + $0x70] sm:$0xff]
        %v222 = vld [vmem:[#allocation7 + $0x78] sm:$0xff]
        %v223 = vld [vmem:[#allocation7 + $0x80] sm:$0xff]
        %v224 = vld [vmem:[#allocation7 + $0x88] sm:$0xff]
        %v225 = vld [vmem:[#allocation7 + $0x90] sm:$0xff]
        %v226 = vld [vmem:[#allocation7 + $0x98] sm:$0xff]
        %v227 = vld [vmem:[#allocation7 + $0xa0] sm:$0xff]
        %v228 = vld [vmem:[#allocation7 + $0xa8] sm:$0xff]
        %v229 = vld [vmem:[#allocation7 + $0xb0] sm:$0xff]
        %v230 = vld [vmem:[#allocation7 + $0xb8] sm:$0xff]
        %v231 = vld [vmem:[#allocation7 + $0xc0] sm:$0xff]
        %v232 = vld [vmem:[#allocation7 + $0xc8] sm:$0xff]
        %v233 = vld [vmem:[#allocation7 + $0xd0] sm:$0xff]
        %v234 = vld [vmem:[#allocation7 + $0xd8] sm:$0xff]
        %v235 = vld [vmem:[#allocation7 + $0xe0] sm:$0xff]
        %v236 = vld [vmem:[#allocation7 + $0xe8] sm:$0xff]
        %v237 = vld [vmem:[#allocation7 + $0xf0] sm:$0xff]
        %v238 = vld [vmem:[#allocation7 + $0xf8] sm:$0xff]
        %v239 = vld [vmem:[#allocation7 + $0x100] sm:$0xff]
        %v240 = vld [vmem:[#allocation7 + $0x108] sm:$0xff]
        %v241 = vld [vmem:[#allocation7 + $0x110] sm:$0xff]
        %v242 = vld [vmem:[#allocation7 + $0x118] sm:$0xff]
        %v243 = vld [vmem:[#allocation7 + $0x120] sm:$0xff]
        %v244 = vld [vmem:[#allocation7 + $0x128] sm:$0xff]
        %v245 = vld [vmem:[#allocation7 + $0x130] sm:$0xff]
        %v246 = vld [vmem:[#allocation7 + $0x138] sm:$0xff]
        %v247 = vld [vmem:[#allocation7 + $0x140] sm:$0xff]
        %v248 = vld [vmem:[#allocation7 + $0x148] sm:$0xff]
        %v249 = vld [vmem:[#allocation7 + $0x150] sm:$0xff]
        %v250 = vld [vmem:[#allocation7 + $0x158] sm:$0xff]
        %v251 = vld [vmem:[#allocation7 + $0x160] sm:$0xff]
        %v252 = vld [vmem:[#allocation7 + $0x168] sm:$0xff]
        %v253 = vld [vmem:[#allocation7 + $0x170] sm:$0xff]
        %v254 = vld [vmem:[#allocation7 + $0x178] sm:$0xff]
        %v255 = vld [vmem:[#allocation7 + $0x180] sm:$0xff]
        %v256 = vld [vmem:[#allocation7 + $0x188] sm:$0xff]
        %v257 = vld [vmem:[#allocation7 + $0x190] sm:$0xff]
        %v258 = vld [vmem:[#allocation7 + $0x198] sm:$0xff]
        %v259 = vld [vmem:[#allocation7 + $0x1a0] sm:$0xff]
        %v260 = vld [vmem:[#allocation7 + $0x1a8] sm:$0xff]
        %v261 = vld [vmem:[#allocation7 + $0x1b0] sm:$0xff]
        %v262 = vld [vmem:[#allocation7 + $0x1b8] sm:$0xff]
        %v263 = vld [vmem:[#allocation7 + $0x1c0] sm:$0xff]
        %v264 = vld [vmem:[#allocation7 + $0x1c8] sm:$0xff]
        %v265 = vld [vmem:[#allocation7 + $0x1d0] sm:$0xff]
        %v266 = vld [vmem:[#allocation7 + $0x1d8] sm:$0xff]
        %v267 = vld [vmem:[#allocation7 + $0x1e0] sm:$0xff]
        %v268 = vld [vmem:[#allocation7 + $0x1e8] sm:$0xff]
        %v269 = vld [vmem:[#allocation7 + $0x1f0] sm:$0xff]
        %v270 = vld [vmem:[#allocation7 + $0x1f8] sm:$0xff]
        %v271 = vld [vmem:[#allocation7 + $0x200] sm:$0x1]
        %v272 = vld [vmem:[%s172] sm:$0x1]
        %273 = vmatprep.subr.mxu0 0.0
        %274 = vmatpush1.msra.mxu0 %v207
        %275 = vmatprep.subr.mxu0 0.0
        %276 = vmatpush1.msra.mxu0 %v208
        %277 = vmatprep.subr.mxu0 0.0
        %278 = vmatpush1.msra.mxu0 %v209
        %279 = vmatprep.subr.mxu0 0.0
        %280 = vmatpush1.msra.mxu0 %v210
        %281 = vmatprep.subr.mxu0 0.0
        %282 = vmatpush1.msra.mxu0 %v211
        %283 = vmatprep.subr.mxu0 0.0
        %284 = vmatpush1.msra.mxu0 %v212
        %285 = vmatprep.subr.mxu0 0.0
        %286 = vmatpush1.msra.mxu0 %v213
        %287 = vmatprep.subr.mxu0 0.0
        %288 = vmatpush1.msra.mxu0 %v214
        %289 = vmatprep.subr.mxu0 0.0
        %290 = vmatpush1.msra.mxu0 %v215
        %291 = vmatprep.subr.mxu0 0.0
        %292 = vmatpush1.msra.mxu0 %v216
        %293 = vmatprep.subr.mxu0 0.0
        %294 = vmatpush1.msra.mxu0 %v217
        %295 = vmatprep.subr.mxu0 0.0
        %296 = vmatpush1.msra.mxu0 %v218
        %297 = vmatprep.subr.mxu0 0.0
        %298 = vmatpush1.msra.mxu0 %v219
        %299 = vmatprep.subr.mxu0 0.0
        %300 = vmatpush1.msra.mxu0 %v220
        %301 = vmatprep.subr.mxu0 0.0
        %302 = vmatpush1.msra.mxu0 %v221
        %303 = vmatprep.subr.mxu0 0.0
        %304 = vmatpush1.msra.mxu0 %v222
        %305 = vmatprep.subr.mxu0 0.0
        %306 = vmatpush1.msra.mxu0 0.0
        %307 = vmatprep.subr.mxu0 0.0
        %308 = vmatpush1.msra.mxu0 0.0
        %309 = vmatprep.subr.mxu0 0.0
        %310 = vmatpush1.msra.mxu0 0.0
        %311 = vmatprep.subr.mxu0 0.0
        %312 = vmatpush1.msra.mxu0 0.0
        %313 = vmatprep.subr.mxu0 0.0
        %314 = vmatpush1.msra.mxu0 0.0
        %315 = vmatprep.subr.mxu0 0.0
        %316 = vmatpush1.msra.mxu0 0.0
        %317 = vmatprep.subr.mxu0 0.0
        %318 = vmatpush1.msra.mxu0 0.0
        %319 = vmatprep.subr.mxu0 0.0
        %320 = vmatpush1.msra.mxu0 0.0
        %321 = vmatprep.subr.mxu0 0.0
        %322 = vmatpush1.msra.mxu0 0.0
        %323 = vmatprep.subr.mxu0 0.0
        %324 = vmatpush1.msra.mxu0 0.0
        %325 = vmatprep.subr.mxu0 0.0
        %326 = vmatpush1.msra.mxu0 0.0
        %327 = vmatprep.subr.mxu0 0.0
        %328 = vmatpush1.msra.mxu0 0.0
        %329 = vmatprep.subr.mxu0 0.0
        %330 = vmatpush1.msra.mxu0 0.0
        %331 = vmatprep.subr.mxu0 0.0
        %332 = vmatpush1.msra.mxu0 0.0
        %333 = vmatprep.subr.mxu0 0.0
        %334 = vmatpush1.msra.mxu0 0.0
        %335 = vmatprep.subr.mxu0 0.0
        %336 = vmatpush1.msra.mxu0 0.0
        %337 = vmatprep.mubr.f32.mxu0 0.0
        %338 = vmatmul.mubr.f32.gmra.mrb[0].mxu0 %v272
        %v339 = vpop.f32.mrb[0].mxu0
        %v340 = vadd.f32 0.0, %v339
        %v341 = vpop.f32.mrb[0].mxu0
        %342 = vdwg.mxu0
        %v343 = vmax.f32 %v340, 0.0
        %344 = vmatprep.subr.mxu0 0.0
        %345 = vmatpush1.msra.mxu0 %v223
        %346 = vmatprep.subr.mxu0 0.0
        %347 = vmatpush1.msra.mxu0 %v224
        %348 = vmatprep.subr.mxu0 0.0
        %349 = vmatpush1.msra.mxu0 %v225
        %350 = vmatprep.subr.mxu0 0.0
        %351 = vmatpush1.msra.mxu0 %v226
        %352 = vmatprep.subr.mxu0 0.0
        %353 = vmatpush1.msra.mxu0 %v227
        %354 = vmatprep.subr.mxu0 0.0
        %355 = vmatpush1.msra.mxu0 %v228
        %356 = vmatprep.subr.mxu0 0.0
        %357 = vmatpush1.msra.mxu0 %v229
        %358 = vmatprep.subr.mxu0 0.0
        %359 = vmatpush1.msra.mxu0 %v230
        %360 = vmatprep.subr.mxu0 0.0
        %361 = vmatpush1.msra.mxu0 %v231
        %362 = vmatprep.subr.mxu0 0.0
        %363 = vmatpush1.msra.mxu0 %v232
        %364 = vmatprep.subr.mxu0 0.0
        %365 = vmatpush1.msra.mxu0 %v233
        %366 = vmatprep.subr.mxu0 0.0
        %367 = vmatpush1.msra.mxu0 %v234
        %368 = vmatprep.subr.mxu0 0.0
        %369 = vmatpush1.msra.mxu0 %v235
        %370 = vmatprep.subr.mxu0 0.0
        %371 = vmatpush1.msra.mxu0 %v236
        %372 = vmatprep.subr.mxu0 0.0
        %373 = vmatpush1.msra.mxu0 %v237
        %374 = vmatprep.subr.mxu0 0.0
        %375 = vmatpush1.msra.mxu0 %v238
        %376 = vmatprep.subr.mxu0 0.0
        %377 = vmatpush1.msra.mxu0 0.0
        %378 = vmatprep.subr.mxu0 0.0
        %379 = vmatpush1.msra.mxu0 0.0
        %380 = vmatprep.subr.mxu0 0.0
        %381 = vmatpush1.msra.mxu0 0.0
        %382 = vmatprep.subr.mxu0 0.0
        %383 = vmatpush1.msra.mxu0 0.0
        %384 = vmatprep.subr.mxu0 0.0
        %385 = vmatpush1.msra.mxu0 0.0
        %386 = vmatprep.subr.mxu0 0.0
        %387 = vmatpush1.msra.mxu0 0.0
        %388 = vmatprep.subr.mxu0 0.0
        %389 = vmatpush1.msra.mxu0 0.0
        %390 = vmatprep.subr.mxu0 0.0
        %391 = vmatpush1.msra.mxu0 0.0
        %392 = vmatprep.subr.mxu0 0.0
        %393 = vmatpush1.msra.mxu0 0.0
        %394 = vmatprep.subr.mxu0 0.0
        %395 = vmatpush1.msra.mxu0 0.0
        %396 = vmatprep.subr.mxu0 0.0
        %397 = vmatpush1.msra.mxu0 0.0
        %398 = vmatprep.subr.mxu0 0.0
        %399 = vmatpush1.msra.mxu0 0.0
        %400 = vmatprep.subr.mxu0 0.0
        %401 = vmatpush1.msra.mxu0 0.0
        %402 = vmatprep.subr.mxu0 0.0
        %403 = vmatpush1.msra.mxu0 0.0
        %404 = vmatprep.subr.mxu0 0.0
        %405 = vmatpush1.msra.mxu0 0.0
        %406 = vmatprep.subr.mxu0 0.0
        %407 = vmatpush1.msra.mxu0 0.0
        %408 = vmatprep.mubr.f32.mxu0 0.0
        %409 = vmatmul.mubr.f32.gmra.mrb[0].mxu0 %v343
        %v410 = vpop.f32.mrb[0].mxu0
        %v411 = vadd.f32 0.0, %v410
        %v412 = vpop.f32.mrb[0].mxu0
        %413 = vdwg.mxu0
        %v414 = vmax.f32 %v411, 0.0
        %v415 = vld [vmem:[#allocation2] sm:$0x1]
        %v416 = vadd.f32 %v414, %v415
        %417 = vmatprep.subr.mxu0 0.0
        %418 = vmatpush1.msra.mxu0 %v239
        %419 = vmatprep.subr.mxu0 0.0
        %420 = vmatpush1.msra.mxu0 %v240
        %421 = vmatprep.subr.mxu0 0.0
        %422 = vmatpush1.msra.mxu0 %v241
        %423 = vmatprep.subr.mxu0 0.0
        %424 = vmatpush1.msra.mxu0 %v242
        %425 = vmatprep.subr.mxu0 0.0
        %426 = vmatpush1.msra.mxu0 %v243
        %427 = vmatprep.subr.mxu0 0.0
        %428 = vmatpush1.msra.mxu0 %v244
        %429 = vmatprep.subr.mxu0 0.0
        %430 = vmatpush1.msra.mxu0 %v245
        %431 = vmatprep.subr.mxu0 0.0
        %432 = vmatpush1.msra.mxu0 %v246
        %433 = vmatprep.subr.mxu0 0.0
        %434 = vmatpush1.msra.mxu0 %v247
        %435 = vmatprep.subr.mxu0 0.0
        %436 = vmatpush1.msra.mxu0 %v248
        %437 = vmatprep.subr.mxu0 0.0
        %438 = vmatpush1.msra.mxu0 %v249
        %439 = vmatprep.subr.mxu0 0.0
        %440 = vmatpush1.msra.mxu0 %v250
        %441 = vmatprep.subr.mxu0 0.0
        %442 = vmatpush1.msra.mxu0 %v251
        %443 = vmatprep.subr.mxu0 0.0
        %444 = vmatpush1.msra.mxu0 %v252
        %445 = vmatprep.subr.mxu0 0.0
        %446 = vmatpush1.msra.mxu0 %v253
        %447 = vmatprep.subr.mxu0 0.0
        %448 = vmatpush1.msra.mxu0 %v254
        %449 = vmatprep.subr.mxu0 0.0
        %450 = vmatpush1.msra.mxu0 0.0
        %451 = vmatprep.subr.mxu0 0.0
        %452 = vmatpush1.msra.mxu0 0.0
        %453 = vmatprep.subr.mxu0 0.0
        %454 = vmatpush1.msra.mxu0 0.0
        %455 = vmatprep.subr.mxu0 0.0
        %456 = vmatpush1.msra.mxu0 0.0
        %457 = vmatprep.subr.mxu0 0.0
        %458 = vmatpush1.msra.mxu0 0.0
        %459 = vmatprep.subr.mxu0 0.0
        %460 = vmatpush1.msra.mxu0 0.0
        %461 = vmatprep.subr.mxu0 0.0
        %462 = vmatpush1.msra.mxu0 0.0
        %463 = vmatprep.subr.mxu0 0.0
        %464 = vmatpush1.msra.mxu0 0.0
        %465 = vmatprep.subr.mxu0 0.0
        %466 = vmatpush1.msra.mxu0 0.0
        %467 = vmatprep.subr.mxu0 0.0
        %468 = vmatpush1.msra.mxu0 0.0
        %469 = vmatprep.subr.mxu0 0.0
        %470 = vmatpush1.msra.mxu0 0.0
        %471 = vmatprep.subr.mxu0 0.0
        %472 = vmatpush1.msra.mxu0 0.0
        %473 = vmatprep.subr.mxu0 0.0
        %474 = vmatpush1.msra.mxu0 0.0
        %475 = vmatprep.subr.mxu0 0.0
        %476 = vmatpush1.msra.mxu0 0.0
        %477 = vmatprep.subr.mxu0 0.0
        %478 = vmatpush1.msra.mxu0 0.0
        %479 = vmatprep.subr.mxu0 0.0
        %480 = vmatpush1.msra.mxu0 0.0
        %481 = vmatprep.mubr.f32.mxu0 0.0
        %482 = vmatmul.mubr.f32.gmra.mrb[0].mxu0 %v416
        %v483 = vpop.f32.mrb[0].mxu0
        %v484 = vadd.f32 %v271, %v483
        %v485 = vpop.f32.mrb[0].mxu0
        %486 = vdwg.mxu0
        %vm487 = vcmp.ge.s32.totalorder %v206, 16
        %vm488 = vcmp.lt.s32.totalorder %v206, 24
        %vm489 = vmand %vm487, %vm488
        %v490 = vtanh.pop %v484
        %v491 = vxor.u32 %v484, 2147483648
        %v492 = vmul.f32 %v491, 1.442695
        %v493 = vpow.pop %v492
        %v494 = vadd.f32 %v493, 1.0
        %v495 = vrcp.pop %v494
        %v496 = vmul.f32 1.0, %v495
        %v497 = vsel %vm489, %v490, %v496
        %v498 = vld [vmem:[#allocation3] sm:$0x1]
        %v500 = vlaneseq
        %v501 = vshrl.u32 %v500, 7
        %v502 = vsub.s32 0, %v501
        %v503 = vrot.slane %v498, %v502
        %504 = vrot.lane.b32.xlu0 %v503, 8
        %v505 = vpop.permute.xlu0 %504
        %v507 = vmul.f32 %v497, %v505
        %509 = vrot.lane.b32.xlu0 %v497, 112
        %v510 = vpop.permute.xlu0 %509
        %v512 = vmul.f32 %v497, %v510
        %514 = vrot.lane.b32.xlu0 %v512, 8
        %v515 = vpop.permute.xlu0 %514
        %v517 = vadd.f32 %v507, %v515
        %v518 = vtanh.pop %v517
        %520 = vrot.lane.b32.xlu0 %v518, 16
        %v521 = vpop.permute.xlu0 %520
        %v523 = vmul.f32 %v497, %v521
        %525 = vrot.lane.b32.xlu0 %v523, 120
        %v526 = vpop.permute.xlu0 %525
        %vm528 = vcmask 188544
        %529 = vst.msk [vmem:[#allocation2] sm:$0x1] %vm528, %v526
        %531 = vrot.lane.b32.xlu0 %v517, 120
        %v532 = vpop.permute.xlu0 %531
        %vm534 = vcmask 57344
        %535 = vst.msk [vmem:[#allocation3] sm:$0x1] %vm534, %v532
        %v536 = vld [vmem:[#allocation2] sm:$0x1]
        %537 = vmatprep.subr.mxu0 0.0
        %538 = vmatpush1.msra.mxu0 %v255
        %539 = vmatprep.subr.mxu0 0.0
        %540 = vmatpush1.msra.mxu0 %v256
        %541 = vmatprep.subr.mxu0 0.0
        %542 = vmatpush1.msra.mxu0 %v257
        %543 = vmatprep.subr.mxu0 0.0
        %544 = vmatpush1.msra.mxu0 %v258
        %545 = vmatprep.subr.mxu0 0.0
        %546 = vmatpush1.msra.mxu0 %v259
        %547 = vmatprep.subr.mxu0 0.0
        %548 = vmatpush1.msra.mxu0 %v260
        %549 = vmatprep.subr.mxu0 0.0
        %550 = vmatpush1.msra.mxu0 %v261
        %551 = vmatprep.subr.mxu0 0.0
        %552 = vmatpush1.msra.mxu0 %v262
        %553 = vmatprep.subr.mxu0 0.0
        %554 = vmatpush1.msra.mxu0 %v263
        %555 = vmatprep.subr.mxu0 0.0
        %556 = vmatpush1.msra.mxu0 %v264
        %557 = vmatprep.subr.mxu0 0.0
        %558 = vmatpush1.msra.mxu0 %v265
        %559 = vmatprep.subr.mxu0 0.0
        %560 = vmatpush1.msra.mxu0 %v266
        %561 = vmatprep.subr.mxu0 0.0
        %562 = vmatpush1.msra.mxu0 %v267
        %563 = vmatprep.subr.mxu0 0.0
        %564 = vmatpush1.msra.mxu0 %v268
        %565 = vmatprep.subr.mxu0 0.0
        %566 = vmatpush1.msra.mxu0 %v269
        %567 = vmatprep.subr.mxu0 0.0
        %568 = vmatpush1.msra.mxu0 %v270
        %569 = vmatprep.subr.mxu0 0.0
        %570 = vmatpush1.msra.mxu0 0.0
        %571 = vmatprep.subr.mxu0 0.0
        %572 = vmatpush1.msra.mxu0 0.0
        %573 = vmatprep.subr.mxu0 0.0
        %574 = vmatpush1.msra.mxu0 0.0
        %575 = vmatprep.subr.mxu0 0.0
        %576 = vmatpush1.msra.mxu0 0.0
        %577 = vmatprep.subr.mxu0 0.0
        %578 = vmatpush1.msra.mxu0 0.0
        %579 = vmatprep.subr.mxu0 0.0
        %580 = vmatpush1.msra.mxu0 0.0
        %581 = vmatprep.subr.mxu0 0.0
        %582 = vmatpush1.msra.mxu0 0.0
        %583 = vmatprep.subr.mxu0 0.0
        %584 = vmatpush1.msra.mxu0 0.0
        %585 = vmatprep.subr.mxu0 0.0
        %586 = vmatpush1.msra.mxu0 0.0
        %587 = vmatprep.subr.mxu0 0.0
        %588 = vmatpush1.msra.mxu0 0.0
        %589 = vmatprep.subr.mxu0 0.0
        %590 = vmatpush1.msra.mxu0 0.0
        %591 = vmatprep.subr.mxu0 0.0
        %592 = vmatpush1.msra.mxu0 0.0
        %593 = vmatprep.subr.mxu0 0.0
        %594 = vmatpush1.msra.mxu0 0.0
        %595 = vmatprep.subr.mxu0 0.0
        %596 = vmatpush1.msra.mxu0 0.0
        %597 = vmatprep.subr.mxu0 0.0
        %598 = vmatpush1.msra.mxu0 0.0
        %599 = vmatprep.subr.mxu0 0.0
        %600 = vmatpush1.msra.mxu0 0.0
        %601 = vmatprep.mubr.f32.mxu0 0.0
        %602 = vmatmul.mubr.f32.gmra.mrb[0].mxu0 %v536
        %v603 = vpop.f32.mrb[0].mxu0
        %v604 = vadd.f32 0.0, %v603
        %v605 = vpop.f32.mrb[0].mxu0
        %606 = vdwg.mxu0
        %vm607 = vcmp.lt.s32.totalorder %v206, 8
        %v608 = vsel %vm607, %v604, -1e+30
        %vm609 = vcmask 1040384
        %v610 = vsel %vm609, %v608, -inf
        %611 = vmax.xlane.f32.xlu0 %v610
        %v612 = vpop.xlane.xlu0 %611
        %v613 = vsub.f32 %v608, %v612
        %v614 = vmul.f32 %v613, 1.442695
        %v615 = vpow.pop %v614
        %v616 = vsel %vm609, %v615, 0.0
        %617 = vadd.xlane.f32.xlu0 %v616
        %v618 = vpop.xlane.xlu0 %617
        %v619 = vrcp.pop %v618
        %v620 = vmul.f32 %v618, %v619
        %v621 = vsub.f32 2.0, %v620
        %v622 = vmul.f32 %v619, %v621
        %v623 = vmul.f32 %v615, %v622
        %vm624 = vcmp.eq.s32.totalorder %v206, 8
        %v625 = vsel %vm624, %v604, 0.0
        %v626 = vadd.f32 %v623, %v625
        %v627 = vadd.f32 %v626, %v536
        %628 = vst [vmem:[%s196] sm:$0x1] %v627
        %629 = vrot.lane.b32.xlu0 %v517, 16
        %v630 = vpop.permute.xlu0 %629
        %vm632 = vcmask 254144
        %633 = vst.msk [vmem:[%s196] sm:$0x1] %vm632, %v630
        %s634 = sand.u32 %s97, 1
        %s635 = scalar_lea.sflag [#allocation6], %s634
        %s636 = sand.u32 %s97, 1
        %s637 = scalar_lea.vmem [#allocation9], %s636
        // Predicated region
        $region45: #{tpu_custom_call.1} parent=31 // pred_check
          %p638 = pneg %p107
        $region46: #{tpu_custom_call.1} parent=31 // pred_check_branch
          %640 = sbr.rel (%p638) target = $region48
        $region47: #{tpu_custom_call.1} parent=31 // pred_region
          %s642 = ssub.s32 16, 16
          %643 = vsyncadd %s635, %s642
          %s644 = smul.addr %s21, 16
          %s645 = scalar_lea.hbm %s3, %s644
          %s647 = sshll.u32 %s637, 4
          %s648 = int_to_ptr.vmem [resolvable:$true] %s647
          %650 = dma.vmem_to_hbm [thread:$0]  %s648, 16, %s645, %s635
        $region48: #{tpu_custom_call.1} parent=31 // pred_fallthru
          _
      $region32: #{tpu_custom_call.1} parent=5 // pred_fallthru
        _
      %p651 = scmp.le.s32.totalorder 2, %s16
      // Predicated region
      $region49: #{tpu_custom_call.1} parent=5 // pred_check
        %p652 = pneg %p651
      $region50: #{tpu_custom_call.1} parent=5 // pred_check_branch
        %654 = sbr.rel (%p652) target = $region52
      $region51: #{tpu_custom_call.1} parent=5 // pred_region
        %s655 = ssub.s32 %s16, 2
        // Predicated region
        $region53: #{tpu_custom_call.1} parent=51 // pred_check
          %p656 = pneg %p113
        $region54: #{tpu_custom_call.1} parent=51 // pred_check_branch
          %658 = sbr.rel (%p656) target = $region56
        $region55: #{tpu_custom_call.1} parent=51 // pred_region
          %s659 = sand.u32 %s98, 1
          %s660 = scalar_lea.sflag [#allocation6], %s659
          %s661 = sand.u32 %s98, 1
          %s662 = scalar_lea.vmem [#allocation9], %s661
          %663 = dma.done %s660, 16
        $region56: #{tpu_custom_call.1} parent=51 // pred_fallthru
          _
      $region52: #{tpu_custom_call.1} parent=5 // pred_fallthru
        _
    $region6: #{tpu_custom_call.1} parent=1 // loop_footer
      %s20 = sadd.s32 1, %s16
    $region7: #{tpu_custom_call.1} parent=1 // loop_footer_branch
      %15 = sbr.rel target = $region3
    $region8: #{tpu_custom_call.1} parent=1 // loop_exit
      _
    %664 = vsyncpa [#allocation5], 1
    %s665 = scalar_lea.sflag [#allocation5], 1
    %666 = vsyncpa %s665, 1
    %667 = vsyncpa [#allocation8], 1
    %668 = vsyncpa [#allocation6], 1
    %s669 = scalar_lea.sflag [#allocation6], 1
    %670 = vsyncpa %s669, 1

</llo_original>
